<compile_context>
chip_gen: v6e
topology: v6e:2x2x1
jax: 0.10.0
libtpu: 0.0.40
codegen_flags: <defaults>
</compile_context>

<pallas_src>
import functools

import jax
import jax.numpy as jnp
from jax.experimental import pallas as pl
from jax.experimental.pallas import tpu as pltpu


def skip_router_kernel(xt_ref, wt_ref, b_ref, o_ref):
    # xt_ref: (indim, TB)      -- batch on the lane axis
    # wt_ref: (outdim, indim)  -- folded weight (transposed)
    # b_ref:  (outdim, 1)      -- folded bias
    # o_ref:  (outdim, TB)
    xt = xt_ref[...].astype(jnp.float32)
    wt = wt_ref[...].astype(jnp.float32)
    indim = xt.shape[0]

    # y[o, j] = sum_i wt[o, i] * xt[i, j] + b[o]
    # Pure VPU broadcast-FMAs (indim is tiny, static unroll); no MXU pass.
    acc = wt[:, 0:1] * xt[0:1, :]
    for i in range(1, indim):
        acc = acc + wt[:, i:i + 1] * xt[i:i + 1, :]
    o_ref[...] = (acc + b_ref[...].astype(jnp.float32)).astype(o_ref.dtype)


@functools.partial(jax.jit, static_argnames=("block_b",))
def skip_router(x, w1, b1, w2, b2, *, block_b=512):
    """Computes (x @ w1 + b1) @ w2 + b2; weights stored as [in_features, out_features]."""
    B, indim = x.shape
    outdim = w2.shape[1]
    assert block_b % 128 == 0, "block_b must be a multiple of 128 (lane width)"

    # --- fold the two affine layers in f32 (exact: no nonlinearity between) ---
    w_fold = jnp.dot(w1.astype(jnp.float32), w2.astype(jnp.float32))        # (indim, outdim)
    b_fold = jnp.dot(b1.astype(jnp.float32), w2.astype(jnp.float32)) + b2   # (1, outdim)
    wt = w_fold.T.astype(jnp.float32)                                       # (outdim, indim)
    bc = b_fold.T.astype(jnp.float32)                                       # (outdim, 1)

    # --- lane-dense layout: put batch on the 128-lane axis, pad to tile ---
    block_b = min(block_b, max(128, pl.cdiv(B, 128) * 128))  # don't over-tile tiny batches
    Bp = pl.cdiv(B, block_b) * block_b
    x_p = jnp.pad(x, ((0, Bp - B), (0, 0))) if Bp != B else x
    xt = x_p.T                                               # (indim, Bp)

    grid = (Bp // block_b,)
    out_t = pl.pallas_call(
        skip_router_kernel,
        out_shape=jax.ShapeDtypeStruct((outdim, Bp), x.dtype),
        grid=grid,
        in_specs=[
            pl.BlockSpec((indim, block_b), lambda i: (0, i)),   # x^T tile (streamed)
            pl.BlockSpec((outdim, indim), lambda i: (0, 0)),    # folded W  (resident)
            pl.BlockSpec((outdim, 1), lambda i: (0, 0)),        # folded b  (resident)
        ],
        out_specs=pl.BlockSpec((outdim, block_b), lambda i: (0, i)),
        compiler_params=pltpu.CompilerParams(
            dimension_semantics=("parallel",),   # shard grid across TensorCores (v7x)
        ),
    )(xt, wt, bc)

    return out_t.T[:B]                                          # (B, outdim)


def init_params(key, indim=3, hidden_dim=128, outdim=1, dtype=jnp.float32):
    """Mimics PyTorch nn.Linear default init: U(-1/sqrt(fan_in), 1/sqrt(fan_in))."""
    k1, k2, k3, k4 = jax.random.split(key, 4)
    bound1 = 1.0 / jnp.sqrt(indim)
    bound2 = 1.0 / jnp.sqrt(hidden_dim)
    # Stored as [in_features, out_features] (transpose of PyTorch's [out, in]).
    w1 = jax.random.uniform(k1, (indim, hidden_dim), dtype, -bound1, bound1)
    b1 = jax.random.uniform(k2, (1, hidden_dim), dtype, -bound1, bound1)
    w2 = jax.random.uniform(k3, (hidden_dim, outdim), dtype, -bound2, bound2)
    b2 = jax.random.uniform(k4, (1, outdim), dtype, -bound2, bound2)
    return w1, b1, w2, b2


if __name__ == "__main__":
    indim, hidden_dim, outdim = 3, 128, 1
    batch = 1000   # not a multiple of the tile -> exercises padding; grid = 2

    key = jax.random.PRNGKey(0)
    kx, kp = jax.random.split(key)
    x = jax.random.normal(kx, (batch, indim), jnp.float32)
    w1, b1, w2, b2 = init_params(kp, indim, hidden_dim, outdim)

    out = skip_router(x, w1, b1, w2, b2, block_b=512)
    out = jax.block_until_ready(out)

    # Pure-JAX reference (unfolded two-layer form).
    ref = (x @ w1 + b1) @ w2 + b2
    assert out.shape == (batch, outdim)
    assert jnp.allclose(out, ref, atol=1e-5, rtol=1e-4), "mismatch vs reference"

    print("KERNEL_OK")
</pallas_src>

<mosaic_0001>
module attributes {stable_mosaic.version = 11 : i64} {
  func.func @skip_router_kernel(%arg0: i32, %arg1: memref<3x512xf32, #tpu.memory_space<vmem>>, %arg2: memref<1x3xf32, #tpu.memory_space<vmem>>, %arg3: memref<1x1xf32, #tpu.memory_space<vmem>>, %arg4: memref<1x512xf32, #tpu.memory_space<vmem>>) attributes {dimension_semantics = [#tpu.dimension_semantics<parallel>], iteration_bounds = array<i64: 2>, scalar_prefetch = 0 : i64, scratch_operands = 0 : i64, tpu.core_type = #tpu.core_type<tc>, window_params = [{transform_indices = @transform_0, window_bounds = array<i64: 3, 512>}, {pipeline_mode = #tpu.pipeline_mode<synchronous>, transform_indices = @transform_1, window_bounds = array<i64: 1, 3>}, {pipeline_mode = #tpu.pipeline_mode<synchronous>, transform_indices = @transform_2, window_bounds = array<i64: 1, 1>}, {transform_indices = @transform_3, window_bounds = array<i64: 1, 512>}]} {
    %c0 = arith.constant 0 : index
    %c0_0 = arith.constant 0 : index
    %0 = vector.load %arg1[%c0, %c0_0] : memref<3x512xf32, #tpu.memory_space<vmem>>, vector<3x512xf32>
    %c0_1 = arith.constant 0 : index
    %c0_2 = arith.constant 0 : index
    %1 = vector.load %arg2[%c0_1, %c0_2] : memref<1x3xf32, #tpu.memory_space<vmem>>, vector<1x3xf32>
    %2 = vector.extract_strided_slice %1 {offsets = [0, 0], sizes = [1, 1], strides = [1, 1]} : vector<1x3xf32> to vector<1x1xf32>
    %3 = vector.extract_strided_slice %0 {offsets = [0, 0], sizes = [1, 512], strides = [1, 1]} : vector<3x512xf32> to vector<1x512xf32>
    %4 = vector.broadcast %2 : vector<1x1xf32> to vector<1x512xf32>
    %5 = arith.mulf %4, %3 : vector<1x512xf32>
    %6 = vector.extract_strided_slice %1 {offsets = [0, 1], sizes = [1, 1], strides = [1, 1]} : vector<1x3xf32> to vector<1x1xf32>
    %7 = vector.extract_strided_slice %0 {offsets = [1, 0], sizes = [1, 512], strides = [1, 1]} : vector<3x512xf32> to vector<1x512xf32>
    %8 = vector.broadcast %6 : vector<1x1xf32> to vector<1x512xf32>
    %9 = arith.mulf %8, %7 : vector<1x512xf32>
    %10 = arith.addf %5, %9 : vector<1x512xf32>
    %11 = vector.extract_strided_slice %1 {offsets = [0, 2], sizes = [1, 1], strides = [1, 1]} : vector<1x3xf32> to vector<1x1xf32>
    %12 = vector.extract_strided_slice %0 {offsets = [2, 0], sizes = [1, 512], strides = [1, 1]} : vector<3x512xf32> to vector<1x512xf32>
    %13 = vector.broadcast %11 : vector<1x1xf32> to vector<1x512xf32>
    %14 = arith.mulf %13, %12 : vector<1x512xf32>
    %15 = arith.addf %10, %14 : vector<1x512xf32>
    %c0_3 = arith.constant 0 : index
    %c0_4 = arith.constant 0 : index
    %16 = vector.load %arg3[%c0_3, %c0_4] : memref<1x1xf32, #tpu.memory_space<vmem>>, vector<1x1xf32>
    %17 = vector.broadcast %16 : vector<1x1xf32> to vector<1x512xf32>
    %18 = arith.addf %15, %17 : vector<1x512xf32>
    %c0_5 = arith.constant 0 : index
    %c0_6 = arith.constant 0 : index
    %19 = vector.load %arg4[%c0_5, %c0_6] : memref<1x512xf32, #tpu.memory_space<vmem>>, vector<1x512xf32>
    tpu.vector_store %arg4[%c0_5, %c0_6], %18 {strides = array<i32>} : memref<1x512xf32, #tpu.memory_space<vmem>>, vector<1x512xf32>,
    return
  }
  func.func @transform_0(%arg0: i32) -> (i32, i32) {
    %c0_i32 = arith.constant 0 : i32
    %c0_i32_0 = arith.constant 0 : i32
    return %c0_i32, %arg0 : i32, i32
  }
  func.func @transform_1(%arg0: i32) -> (i32, i32) {
    %c0_i32 = arith.constant 0 : i32
    %c0_i32_0 = arith.constant 0 : i32
    %c0_i32_1 = arith.constant 0 : i32
    return %c0_i32, %c0_i32_0 : i32, i32
  }
  func.func @transform_2(%arg0: i32) -> (i32, i32) {
    %c0_i32 = arith.constant 0 : i32
    %c0_i32_0 = arith.constant 0 : i32
    %c0_i32_1 = arith.constant 0 : i32
    return %c0_i32, %c0_i32_0 : i32, i32
  }
  func.func @transform_3(%arg0: i32) -> (i32, i32) {
    %c0_i32 = arith.constant 0 : i32
    %c0_i32_0 = arith.constant 0 : i32
    return %c0_i32, %arg0 : i32, i32
  }
}

</mosaic_0001>

<llo_original>
// kernel: skip_router.1
$region0: #{skip_router.1}
  #allocation0 [shape = 'u32[]', space=smem, size = 0x4, offset = 0x4, fixed_abs, tag = 'smem constant byte address 0x4 - core index']
  #allocation1 [shape = 'u32[144,128]{1,0:T(1,128)}', space=vmem, size = 0x12000, scoped, tag = 'internal scratch']
  #allocation2 [shape = 'f32[1,1]{1,0:T(1,128)S(1)}', space=vmem, size = 0x200, scoped, tag = 'scoped memory for skip_router.1']
  %s0 = inlined_call_operand.vmem [shape: f32[3,1024], index: 0, kind: input, shape index: {}]
  %s1 = inlined_call_operand.vmem [shape: f32[1,3], index: 1, kind: input, shape index: {}]
  %s2 = inlined_call_operand.<no memory space> [shape: f32[1,1], index: 2, kind: input, shape index: {}]
  %s3 = inlined_call_operand.vmem [shape: f32[1,1024], index: 3, kind: output, shape index: {}]
  %s4 = sld [smem:[#allocation0]]
  $region45: #{skip_router.1} parent=0
    _
  %s6 = ssub.s32 1, %s4
  %s7 = scalar_select 0, %s6, %s4
  %v8 = vstv %s2
  %9 = vst [vmem:[#allocation2] sm:$0x1] %v8
  loop: start=0, step=1, limit=4
  $region2: #{skip_router.1} parent=0 // loop_pre_header
    _
  $region3: #{skip_router.1} parent=0 // loop_header
    %s11 = sphi 0, %s15
    %p12 = scmp.ge.s32.totalorder %s11, 4
    %s21 = sphi 0, %s23
    %s24 = sphi 0, %s21
    %s25 = sphi 0, %s24
    %s41 = sphi 0, %s25
    %s45 = sphi 0, %s45
    %s47 = sphi 0, %s45
    %s48 = sphi 0, %s47
    %s62 = sphi 0, %s48
    %s66 = sphi 0, %s66
    %s68 = sphi 0, %s66
    %s69 = sphi 0, %s68
    %s83 = sphi 0, %s69
    %s89 = sphi 0, %s91
    %s92 = sphi 0, %s89
    %s93 = sphi 0, %s92
    %s109 = sphi 0, %s93
  $region4: #{skip_router.1} parent=0 // loop_header_branch
    %14 = sbr.rel (%p12) target = $region8
  $region5: #{skip_router.1} parent=0 // loop_body
    %s16 = ssub.s32 %s11, 1
    %s17 = ssub.s32 %s11, 2
    %s18 = sadd.s32 %s11, 1
    %s19 = ssub.s32 %s11, %s18
    %p20 = scmp.eq.s32.totalorder %s19, 0
    %s22 = sadd.s32 %s21, 1
    %s23 = scalar_select %p20, %s21, %s22
    %p26 = pneg %p20
    %p27 = scmp.eq.s32.totalorder %s11, 1
    %p28 = por %p26, %p27
    %p29 = scmp.ne.s32.totalorder %s21, %s24
    %p30 = scmp.eq.s32.totalorder %s11, 0
    %p31 = por %p29, %p30
    %p32 = scmp.ne.s32.totalorder %s21, %s24
    %p33 = scmp.eq.s32.totalorder %s16, 1
    %p34 = por %p32, %p33
    %p35 = scmp.ne.s32.totalorder %s24, %s25
    %p36 = scmp.eq.s32.totalorder %s16, 0
    %p37 = por %p35, %p36
    %p38 = scmp.ne.s32.totalorder %s24, %s25
    %p39 = scmp.eq.s32.totalorder %s17, 1
    %p40 = por %p38, %p39
    %p42 = scmp.ne.s32.totalorder %s25, %s41
    %p43 = scmp.eq.s32.totalorder %s17, 0
    %p44 = por %p42, %p43
    %s46 = sadd.s32 %s45, 1
    %p49 = scmp.eq.s32.totalorder %s11, 1
    %p50 = scmp.ne.s32.totalorder %s45, %s47
    %p51 = scmp.eq.s32.totalorder %s11, 0
    %p52 = por %p50, %p51
    %p53 = scmp.ne.s32.totalorder %s45, %s47
    %p54 = scmp.eq.s32.totalorder %s16, 1
    %p55 = por %p53, %p54
    %p56 = scmp.ne.s32.totalorder %s47, %s48
    %p57 = scmp.eq.s32.totalorder %s16, 0
    %p58 = por %p56, %p57
    %p59 = scmp.ne.s32.totalorder %s47, %s48
    %p60 = scmp.eq.s32.totalorder %s17, 1
    %p61 = por %p59, %p60
    %p63 = scmp.ne.s32.totalorder %s48, %s62
    %p64 = scmp.eq.s32.totalorder %s17, 0
    %p65 = por %p63, %p64
    %s67 = sadd.s32 %s66, 1
    %p70 = scmp.eq.s32.totalorder %s11, 1
    %p71 = scmp.ne.s32.totalorder %s66, %s68
    %p72 = scmp.eq.s32.totalorder %s11, 0
    %p73 = por %p71, %p72
    %p74 = scmp.ne.s32.totalorder %s66, %s68
    %p75 = scmp.eq.s32.totalorder %s16, 1
    %p76 = por %p74, %p75
    %p77 = scmp.ne.s32.totalorder %s68, %s69
    %p78 = scmp.eq.s32.totalorder %s16, 0
    %p79 = por %p77, %p78
    %p80 = scmp.ne.s32.totalorder %s68, %s69
    %p81 = scmp.eq.s32.totalorder %s17, 1
    %p82 = por %p80, %p81
    %p84 = scmp.ne.s32.totalorder %s69, %s83
    %p85 = scmp.eq.s32.totalorder %s17, 0
    %p86 = por %p84, %p85
    %s87 = ssub.s32 %s11, %s18
    %p88 = scmp.eq.s32.totalorder %s87, 0
    %s90 = sadd.s32 %s89, 1
    %s91 = scalar_select %p88, %s89, %s90
    %p94 = pneg %p88
    %p95 = scmp.eq.s32.totalorder %s11, 1
    %p96 = por %p94, %p95
    %p97 = scmp.ne.s32.totalorder %s89, %s92
    %p98 = scmp.eq.s32.totalorder %s11, 0
    %p99 = por %p97, %p98
    %p100 = scmp.ne.s32.totalorder %s89, %s92
    %p101 = scmp.eq.s32.totalorder %s16, 1
    %p102 = por %p100, %p101
    %p103 = scmp.ne.s32.totalorder %s92, %s93
    %p104 = scmp.eq.s32.totalorder %s16, 0
    %p105 = por %p103, %p104
    %p106 = scmp.ne.s32.totalorder %s92, %s93
    %p107 = scmp.eq.s32.totalorder %s17, 1
    %p108 = por %p106, %p107
    %p110 = scmp.ne.s32.totalorder %s93, %s109
    %p111 = scmp.eq.s32.totalorder %s17, 0
    %p112 = por %p110, %p111
    %p113 = scmp.le.s32.totalorder 1, %s11
    %p114 = scmp.lt.s32.totalorder %s11, 3
    %p115 = pnand %p113, %p114
    %p116 = pneg %p115
    // Predicated region
    $region9: #{skip_router.1} parent=5 // pred_check
      _
    $region10: #{skip_router.1} parent=5 // pred_check_branch
      %118 = sbr.rel (%p115) target = $region12
    $region11: #{skip_router.1} parent=5 // pred_region
      %s119 = ssub.s32 %s11, 1
      // Predicated region
      $region13: #{skip_router.1} parent=11 // pred_check
        %p120 = pneg %p58
      $region14: #{skip_router.1} parent=11 // pred_check_branch
        %122 = sbr.rel (%p120) target = $region16
      $region15: #{skip_router.1} parent=11 // pred_region
        _
      $region16: #{skip_router.1} parent=11 // pred_fallthru
        _
      // Predicated region
      $region17: #{skip_router.1} parent=11 // pred_check
        %p123 = pneg %p79
      $region18: #{skip_router.1} parent=11 // pred_check_branch
        %125 = sbr.rel (%p123) target = $region20
      $region19: #{skip_router.1} parent=11 // pred_region
        _
      $region20: #{skip_router.1} parent=11 // pred_fallthru
        _
    $region12: #{skip_router.1} parent=5 // pred_fallthru
      _
    %p126 = scmp.lt.s32.totalorder %s11, 2
    // Predicated region
    $region21: #{skip_router.1} parent=5 // pred_check
      %p127 = pneg %p126
    $region22: #{skip_router.1} parent=5 // pred_check_branch
      %129 = sbr.rel (%p127) target = $region24
    $region23: #{skip_router.1} parent=5 // pred_region
      // Predicated region
      $region25: #{skip_router.1} parent=23 // pred_check
        %p130 = pneg %p31
      $region26: #{skip_router.1} parent=23 // pred_check_branch
        %132 = sbr.rel (%p130) target = $region28
      $region27: #{skip_router.1} parent=23 // pred_region
        %s133 = smul.u32 4, %s11
        %p134 = scmp.lt.s32.totalorder %s133, 7
        %s135 = scalar_select %p134, %s133, 7
        %s136 = smul.addr %s135, 4
        %s137 = scalar_lea.vmem %s0, %s136
        %s138 = smul.u32 4, %s11
      $region28: #{skip_router.1} parent=23 // pred_fallthru
        _
    $region24: #{skip_router.1} parent=5 // pred_fallthru
      _
    %p139 = scmp.le.s32.totalorder 1, %s11
    %p140 = scmp.lt.s32.totalorder %s11, 3
    %p141 = pnand %p139, %p140
    %p142 = pneg %p141
    // Predicated region
    $region29: #{skip_router.1} parent=5 // pred_check
      _
    $region30: #{skip_router.1} parent=5 // pred_check_branch
      %144 = sbr.rel (%p141) target = $region32
    $region31: #{skip_router.1} parent=5 // pred_region
      %s145 = ssub.s32 %s11, 1
      %s146 = smul.u32 4, %s16
      %p147 = scmp.lt.s32.totalorder %s146, 7
      %s148 = scalar_select %p147, %s146, 7
      %s149 = smul.addr %s148, 4
      %s150 = scalar_lea.vmem %s0, %s149
      %p151 = pneg %p37
      %p152 = pneg %p34
      %p153 = pneg %p58
      %p154 = pneg %p55
      %p155 = pneg %p79
      %p156 = pneg %p76
      %p157 = pneg %p105
      %p158 = pneg %p102
      %s159 = smul.u32 4, %s16
      %p160 = scmp.lt.s32.totalorder %s159, 7
      %s161 = scalar_select %p160, %s159, 7
      %s162 = scalar_lea.vmem %s3, %s161
      %s163 = smul.u32 4, %s16
      %p164 = scmp.lt.s32.totalorder %s163, 7
      %s165 = scalar_select %p164, %s163, 7
      %s166 = smul.addr %s165, 4
      %s167 = scalar_lea.vmem %s0, %s166
      %s168 = smul.u32 4, %s16
      %s169 = smul.u32 4, %s16
      %p170 = scmp.lt.s32.totalorder %s169, 7
      %s171 = scalar_select %p170, %s169, 7
      %s172 = scalar_lea.vmem %s3, %s171
      %s173 = smul.u32 4, %s16
      %v174 = vld [vmem:[%s167] sm:$0x77]
      %v175 = vld [vmem:[%s167 + $0x8] sm:$0x77]
      %v176 = vld [vmem:[%s1] sm:$0x1]
      %178 = vset.pattern.permute.xlu0 0
      %179 = vperm.xlu0 %178, %v176
      %v180 = vpop.permute.xlu0 %179
      %v182 = vlaneseq
      %v183 = vshrl.u32 %v182, 7
      %v184 = vsub.s32 0, %v183
      %v185 = vrot.slane %v180, %v184
      %v186 = vmul.f32 %v185, %v174
      %v187 = vmul.f32 %v185, %v175
      %188 = vset.pattern.permute.xlu0 1
      %189 = vperm.xlu0 %188, %v176
      %v190 = vpop.permute.xlu0 %189
      %v192 = vlaneseq
      %v193 = vshrl.u32 %v192, 7
      %v194 = vsub.s32 0, %v193
      %v195 = vrot.slane %v190, %v194
      %v196 = vmul.f32 %v195, %v174
      %v197 = vmul.f32 %v195, %v175
      %v200 = vrot.slane %v196, 5
      %v201 = vrot.slane %v200, 4
      %v202 = vrot.slane %v197, 5
      %v203 = vrot.slane %v202, 4
      %v206 = vadd.f32 %v186, %v201
      %v207 = vadd.f32 %v187, %v203
      %208 = vset.pattern.permute.xlu0 2
      %209 = vperm.xlu0 %208, %v176
      %v210 = vpop.permute.xlu0 %209
      %v212 = vlaneseq
      %v213 = vshrl.u32 %v212, 7
      %v214 = vsub.s32 0, %v213
      %v215 = vrot.slane %v210, %v214
      %v216 = vmul.f32 %v215, %v174
      %v217 = vmul.f32 %v215, %v175
      %v220 = vrot.slane %v216, 6
      %v221 = vrot.slane %v220, 4
      %v222 = vrot.slane %v217, 6
      %v223 = vrot.slane %v222, 4
      %v226 = vadd.f32 %v206, %v221
      %v227 = vadd.f32 %v207, %v223
      %v228 = vld [vmem:[#allocation2] sm:$0x1]
      %230 = vset.pattern.permute.xlu0 0
      %231 = vperm.xlu0 %230, %v228
      %v232 = vpop.permute.xlu0 %231
      %v234 = vlaneseq
      %v235 = vshrl.u32 %v234, 7
      %v236 = vsub.s32 0, %v235
      %v237 = vrot.slane %v232, %v236
      %v238 = vadd.f32 %v226, %v237
      %v239 = vadd.f32 %v227, %v237
      %v243 = vunpack.c.l.s4 1966171168
      %v244 = vunpack.c.0.s8 %v243
      %v245 = vlaneseq
      %v246 = vshrl.u32 %v245, 7
      %v247 = vsub.s32 %v244, %v246
      %v248 = vrot.slane %v238, %v247
      %v250 = vunpack.c.l.s4 1966171168
      %v251 = vunpack.c.0.s8 %v250
      %v252 = vlaneseq
      %v253 = vshrl.u32 %v252, 7
      %v254 = vsub.s32 %v251, %v253
      %v255 = vrot.slane %v239, %v254
      %v256 = vcombine.low %v248, %v255
      %v258 = vunpack.c.l.s4 1966171168
      %v259 = vunpack.c.0.s8 %v258
      %v260 = vlaneseq
      %v261 = vshrl.u32 %v260, 7
      %v262 = vsub.s32 %v259, %v261
      %v263 = vrot.slane %v256, %v262
      %v265 = vlaneseq
      %vm266 = vcmp.ge.s32.totalorder %v265, 0
      %vm267 = vcmp.lt.s32.totalorder %v265, 512
      %vm268 = vmand %vm266, %vm267
      %269 = vst.msk [vmem:[%s172] sm:$0xf] %vm268, %v263
      %s270 = smul.u32 4, %s16
      %p271 = scmp.lt.s32.totalorder %s270, 7
      %s272 = scalar_select %p271, %s270, 7
      %s273 = scalar_lea.vmem %s3, %s272
      // Predicated region
      $region33: #{skip_router.1} parent=31 // pred_check
        %p274 = pneg %p102
      $region34: #{skip_router.1} parent=31 // pred_check_branch
        %276 = sbr.rel (%p274) target = $region36
      $region35: #{skip_router.1} parent=31 // pred_region
        %s277 = smul.u32 4, %s16
      $region36: #{skip_router.1} parent=31 // pred_fallthru
        _
    $region32: #{skip_router.1} parent=5 // pred_fallthru
      _
    %p278 = scmp.le.s32.totalorder 2, %s11
    // Predicated region
    $region37: #{skip_router.1} parent=5 // pred_check
      %p279 = pneg %p278
    $region38: #{skip_router.1} parent=5 // pred_check_branch
      %281 = sbr.rel (%p279) target = $region40
    $region39: #{skip_router.1} parent=5 // pred_region
      %s282 = ssub.s32 %s11, 2
      // Predicated region
      $region41: #{skip_router.1} parent=39 // pred_check
        %p283 = pneg %p108
      $region42: #{skip_router.1} parent=39 // pred_check_branch
        %285 = sbr.rel (%p283) target = $region44
      $region43: #{skip_router.1} parent=39 // pred_region
        %s286 = smul.u32 4, %s17
        %p287 = scmp.lt.s32.totalorder %s286, 7
        %s288 = scalar_select %p287, %s286, 7
        %s289 = scalar_lea.vmem %s3, %s288
      $region44: #{skip_router.1} parent=39 // pred_fallthru
        _
    $region40: #{skip_router.1} parent=5 // pred_fallthru
      _
  $region6: #{skip_router.1} parent=0 // loop_footer
    %s15 = sadd.s32 1, %s11
  $region7: #{skip_router.1} parent=0 // loop_footer_branch
    %10 = sbr.rel target = $region3
  $region8: #{skip_router.1} parent=0 // loop_exit
    _

</llo_original>
